<compile_context>
chip_gen: v6e
topology: v6e:2x2x1
jax: 0.10.0
libtpu: 0.0.40
codegen_flags: <defaults>
</compile_context>

<pallas_src>
import jax
import jax.numpy as jnp
import numpy as np
from jax.experimental import pallas as pl
from jax.experimental.pallas import tpu as pltpu


def make_stsgcl_kernel(B, N, L, wpb, strides, cout):
    """Kernel for one group of `wpb` consecutive sliding windows."""
    bn = B * N
    rows = strides * bn            # 3*B*N rows, ordered (t_local, b, n)

    def kernel(*refs):
        x_ref = refs[0]                      # (T, B, N, Cin)  bf16, whole x (T small)
        a_ref = refs[1]                      # (3BN, 3BN)      bf16, batch-blockdiag adj
        layer_refs = refs[2:2 + 2 * L]       # per layer: Wp (1, wpb*Cin_l, wpb*2Cout) bf16,
                                             #            bp (1, 1, wpb*2Cout) f32
        wc_ref = refs[2 + 2 * L]             # (2, Cin, Cout)  bf16  (D_CN taps 0 and +2)
        bc_ref = refs[3 + 2 * L]             # (1, Cout)       f32
        out_ref = refs[4 + 2 * L]            # (B, wpb, N, Cout) f32

        cin = x_ref.shape[-1]
        i0 = pl.program_id(0) * wpb          # first window handled by this step

        a_bf = a_ref[...]                    # shared by all layers of this step

        # Lane-fused GCN input: (3BN, wpb*Cin), lanes ordered (window, cin).
        # One concat per grid step (not per layer / per window).
        h = jnp.concatenate(
            [x_ref[pl.ds(i0 + w, strides)].reshape(rows, cin) for w in range(wpb)],
            axis=-1)

        acc = None
        for l in range(L):
            wp = layer_refs[2 * l][0]        # (wpb*Cin_l, wpb*2Cout) bf16, block-diag
            bp = layer_refs[2 * l + 1][0]    # (1, wpb*2Cout) f32

            # Graph aggregation: one matmul (batch folded via block-diag adjacency).
            agg = jnp.dot(a_bf, h.astype(jnp.bfloat16),
                          preferred_element_type=jnp.float32)
            # Fused GLU projection for all windows of the step: one matmul.
            z = jnp.dot(agg.astype(jnp.bfloat16), wp,
                        preferred_element_type=jnp.float32) + bp
            half = z.shape[-1] // 2          # = wpb * cout  (lhs block | rhs block)
            h = z[:, :half] * jax.nn.sigmoid(z[:, half:])     # (3BN, wpb*Cout) f32

            # Layer max restricted to the middle time-slab (single contiguous slice).
            h_mid = h[bn:2 * bn, :]                            # (B*N, wpb*Cout)
            acc = h_mid if acc is None else jnp.maximum(acc, h_mid)

        # D_CN residual (dilation-2 (1,2) conv == taps at time offsets 0 and +2),
        # row-fused across the group's windows: rows ordered (window, b, n).
        x0 = x_ref[pl.ds(i0, wpb)].reshape(wpb * bn, cin)
        x2 = x_ref[pl.ds(i0 + (strides - 1), wpb)].reshape(wpb * bn, cin)
        dcn = (jnp.dot(x0, wc_ref[0], preferred_element_type=jnp.float32)
               + jnp.dot(x2, wc_ref[1], preferred_element_type=jnp.float32)
               + bc_ref[...])                                  # (wpb*B*N, Cout) f32

        # Direct per-window stores into the consumer-layout output (no lane concat).
        for w in range(wpb):
            res = acc[:, w * cout:(w + 1) * cout] + dcn[w * bn:(w + 1) * bn, :]
            out_ref[:, pl.ds(w, 1), :, :] = (
                res.reshape(B, 1, N, cout).astype(out_ref.dtype))

    return kernel


def _pick_wpb(Wn):
    """Largest divisor of Wn that still leaves >= 2 equal grid steps (v7x megacore)."""
    best = 1
    for d in range(1, Wn // 2 + 1):
        if Wn % d == 0:
            best = d
    return best


def stsgcl_forward(x, temb, semb, adj, gcn_Ws, gcn_bs, Wc0, Wc1, bc, strides=3):
    """x: (B, T, N, Cin) -> (B, T-strides+1, N, Cout).

    gcn_Ws[l]: (Wn, Cin_l, 2*Cout)   per-window GLU projection (Linear.weight.T)
    gcn_bs[l]: (Wn, 1, 2*Cout)
    Wc0/Wc1 : (Cin, Cout)            dilation-2 conv taps,  bc: (1, Cout)
    """
    B, T, N, Cin = x.shape
    L = len(gcn_Ws)
    Cout = gcn_Ws[0].shape[-1] // 2
    Wn = T - strides + 1
    bn = B * N
    rows = strides * bn
    assert strides == 3, "module semantics (GCN windows + D_CN residual add) require strides==3"
    assert T >= 4, "D_CN receptive field (4) not covered; padding path not implemented"
    assert all(w.shape[0] == Wn for w in gcn_Ws) and all(b.shape[0] == Wn for b in gcn_bs)

    wpb = _pick_wpb(Wn)
    ngroups = Wn // wpb

    # Positional embeddings (elementwise, left to XLA), layout to (T, B, N, Cin) so a
    # kernel time-slice reshapes for free into (3BN, Cin) rows ordered (t, b, n); cast
    # once to bf16 (it is only ever an MXU operand; bf16-level tolerance documented).
    xT = jnp.transpose(x + temb + semb, (1, 0, 2, 3)).astype(jnp.bfloat16)

    # Batch-block-diagonal adjacency, permuted to the (t, b, n) row order:
    # A[(t,b,n),(t',b',n')] = adj[t*N+n, t'*N+n'] * delta(b, b').
    adj4 = adj.reshape(strides, N, strides, N)
    A = jnp.einsum("tnsm,bd->tbnsdm", adj4, jnp.eye(B, dtype=adj.dtype))
    A = A.reshape(rows, rows).astype(jnp.bfloat16)

    # Per-group block-diagonal GLU weights with [all-lhs | all-rhs] column order so the
    # GLU split is one lane slice and layer l+1 consumes layer l's lane order unchanged.
    eye_w = jnp.eye(wpb, dtype=jnp.float32)
    packed = []
    for Wl, bl in zip(gcn_Ws, gcn_bs):
        cin_l = Wl.shape[1]
        Wg = Wl.reshape(ngroups, wpb, cin_l, 2 * Cout)
        lhs, rhs = Wg[..., :Cout], Wg[..., Cout:]
        Wlhs = jnp.einsum("gwcd,wv->gwcvd", lhs, eye_w).reshape(ngroups, wpb * cin_l, wpb * Cout)
        Wrhs = jnp.einsum("gwcd,wv->gwcvd", rhs, eye_w).reshape(ngroups, wpb * cin_l, wpb * Cout)
        Wp = jnp.concatenate([Wlhs, Wrhs], axis=-1).astype(jnp.bfloat16)
        bg = bl.reshape(ngroups, wpb, 2 * Cout)
        bp = jnp.concatenate(
            [bg[..., :Cout].reshape(ngroups, 1, wpb * Cout),
             bg[..., Cout:].reshape(ngroups, 1, wpb * Cout)], axis=-1).astype(jnp.float32)
        packed.append((Wp, bp))

    Wc = jnp.stack([Wc0, Wc1], axis=0).astype(jnp.bfloat16)   # (2, Cin, Cout)
    bc_f = bc.astype(jnp.float32)

    operands = [xT, A]
    in_specs = [
        pl.BlockSpec((T, B, N, Cin), lambda g: (0, 0, 0, 0)),   # whole x (T is small)
        pl.BlockSpec((rows, rows), lambda g: (0, 0)),
    ]
    for Wp, bp in packed:
        operands += [Wp, bp]
        in_specs += [
            pl.BlockSpec((1,) + Wp.shape[1:], lambda g: (g, 0, 0)),
            pl.BlockSpec((1,) + bp.shape[1:], lambda g: (g, 0, 0)),
        ]
    operands += [Wc, bc_f]
    in_specs += [
        pl.BlockSpec(Wc.shape, lambda g: (0, 0, 0)),
        pl.BlockSpec(bc_f.shape, lambda g: (0, 0)),
    ]

    # Output directly in consumer layout (B, Wn, N, Cout): no wrapper transpose needed.
    out = pl.pallas_call(
        make_stsgcl_kernel(B, N, L, wpb, strides, Cout),
        out_shape=jax.ShapeDtypeStruct((B, Wn, N, Cout), jnp.float32),
        grid=(ngroups,),
        in_specs=in_specs,
        out_specs=pl.BlockSpec((B, wpb, N, Cout), lambda g: (0, g, 0, 0)),
        compiler_params=pltpu.CompilerParams(dimension_semantics=("parallel",)),
    )(*operands)
    return out


def stsgcl_reference(x, temb, semb, adj, gcn_Ws, gcn_bs, Wc0, Wc1, bc, strides=3):
    """Pure-JAX reference mirroring the PyTorch forward semantics (f32, highest precision)."""
    x = x + temb + semb
    B, T, N, Cin = x.shape
    Cout = Wc0.shape[1]
    Wn = T - strides + 1

    outs = []
    for i in range(Wn):
        t = x[:, i:i + strides].reshape(B, strides * N, Cin)
        h = jnp.transpose(t, (1, 0, 2))                      # (3N, B, Cin)
        acc = None
        for l in range(len(gcn_Ws)):
            Wl = gcn_Ws[l][i]                                # per-window weights
            bl = gcn_bs[l][i]
            g = jnp.einsum("nm,mbc->nbc", adj, h, precision="highest")
            z = jnp.einsum("nbc,cd->nbd", g, Wl, precision="highest") + bl
            lhs, rhs = z[..., :Cout], z[..., Cout:]
            h = lhs * jax.nn.sigmoid(rhs)
            sl = h[N:2 * N]
            acc = sl if acc is None else jnp.maximum(acc, sl)
        outs.append(jnp.transpose(acc, (1, 0, 2)))           # (B, N, Cout)
    out = jnp.stack(outs, axis=1)                            # (B, Wn, N, Cout)

    # D_CN: last conv only (dilation 2, kernel (1,2)), time taps 0 and +2.
    dcn = (jnp.einsum("btnc,co->btno", x[:, :Wn], Wc0, precision="highest")
           + jnp.einsum("btnc,co->btno", x[:, 2:2 + Wn], Wc1, precision="highest")
           + bc[0])
    return out + dcn


if __name__ == "__main__":
    B, T, N, Cin, Cout = 2, 6, 8, 16, 32
    strides, L = 3, 2
    Wn = T - strides + 1

    key = jax.random.PRNGKey(0)
    keys = jax.random.split(key, 16)
    x = jax.random.normal(keys[0], (B, T, N, Cin), jnp.float32)
    temb = 3e-4 * jax.random.normal(keys[1], (1, T, 1, Cin), jnp.float32)
    semb = 3e-4 * jax.random.normal(keys[2], (1, 1, N, Cin), jnp.float32)
    adj = 0.1 * jax.random.normal(keys[3], (strides * N, strides * N), jnp.float32)

    gcn_Ws, gcn_bs = [], []
    c_in, kidx = Cin, 4
    for _ in range(L):
        gcn_Ws.append(0.1 * jax.random.normal(keys[kidx], (Wn, c_in, 2 * Cout), jnp.float32)); kidx += 1
        gcn_bs.append(0.1 * jax.random.normal(keys[kidx], (Wn, 1, 2 * Cout), jnp.float32)); kidx += 1
        c_in = Cout
    Wc0 = 0.1 * jax.random.normal(keys[kidx], (Cin, Cout), jnp.float32); kidx += 1
    Wc1 = 0.1 * jax.random.normal(keys[kidx], (Cin, Cout), jnp.float32); kidx += 1
    bc = 0.1 * jax.random.normal(keys[kidx], (1, Cout), jnp.float32); kidx += 1

    out = stsgcl_forward(x, temb, semb, adj, gcn_Ws, gcn_bs, Wc0, Wc1, bc, strides=strides)
    out = jax.block_until_ready(out)

    ref = stsgcl_reference(x, temb, semb, adj, gcn_Ws, gcn_bs, Wc0, Wc1, bc, strides=strides)
    ref = jax.block_until_ready(ref)

    assert out.shape == (B, Wn, N, Cout), out.shape
    # Kernel uses bf16 MXU operands (f32 accumulation); reference is f32/highest, hence
    # the bf16-level tolerance.
    np.testing.assert_allclose(np.asarray(out), np.asarray(ref), atol=3e-2, rtol=3e-2)
    print("KERNEL_OK")
</pallas_src>

<mosaic_0001>
module attributes {stable_mosaic.version = 11 : i64} {
  func.func @kernel(%arg0: i32, %arg1: memref<6x2x8x16xbf16, #tpu.memory_space<vmem>>, %arg2: memref<48x48xbf16, #tpu.memory_space<vmem>>, %arg3: memref<1x32x128xbf16, #tpu.memory_space<vmem>>, %arg4: memref<1x1x128xf32, #tpu.memory_space<vmem>>, %arg5: memref<1x64x128xbf16, #tpu.memory_space<vmem>>, %arg6: memref<1x1x128xf32, #tpu.memory_space<vmem>>, %arg7: memref<2x16x32xbf16, #tpu.memory_space<vmem>>, %arg8: memref<1x32xf32, #tpu.memory_space<vmem>>, %arg9: memref<2x2x8x32xf32, #tpu.memory_space<vmem>>) attributes {dimension_semantics = [#tpu.dimension_semantics<parallel>], iteration_bounds = array<i64: 2>, scalar_prefetch = 0 : i64, scratch_operands = 0 : i64, tpu.core_type = #tpu.core_type<tc>, window_params = [{pipeline_mode = #tpu.pipeline_mode<synchronous>, transform_indices = @transform_0, window_bounds = array<i64: 6, 2, 8, 16>}, {pipeline_mode = #tpu.pipeline_mode<synchronous>, transform_indices = @transform_1, window_bounds = array<i64: 48, 48>}, {transform_indices = @transform_2, window_bounds = array<i64: 1, 32, 128>}, {transform_indices = @transform_3, window_bounds = array<i64: 1, 1, 128>}, {transform_indices = @transform_4, window_bounds = array<i64: 1, 64, 128>}, {transform_indices = @transform_5, window_bounds = array<i64: 1, 1, 128>}, {pipeline_mode = #tpu.pipeline_mode<synchronous>, transform_indices = @transform_6, window_bounds = array<i64: 2, 16, 32>}, {pipeline_mode = #tpu.pipeline_mode<synchronous>, transform_indices = @transform_7, window_bounds = array<i64: 1, 32>}, {transform_indices = @transform_8, window_bounds = array<i64: 2, 2, 8, 32>}]} {
    %c2_i32 = arith.constant 2 : i32
    %0 = arith.muli %arg0, %c2_i32 : i32
    %c0 = arith.constant 0 : index
    %c0_0 = arith.constant 0 : index
    %1 = vector.load %arg2[%c0, %c0_0] : memref<48x48xbf16, #tpu.memory_space<vmem>>, vector<48x48xbf16>
    %c0_i32 = arith.constant 0 : i32
    %2 = arith.addi %0, %c0_i32 : i32
    %3 = arith.index_cast %2 : i32 to index
    %c0_1 = arith.constant 0 : index
    %c0_2 = arith.constant 0 : index
    %c0_3 = arith.constant 0 : index
    %4 = vector.load %arg1[%3, %c0_1, %c0_2, %c0_3] : memref<6x2x8x16xbf16, #tpu.memory_space<vmem>>, vector<3x2x8x16xbf16>
    %5 = vector.shape_cast %4 : vector<3x2x8x16xbf16> to vector<48x16xbf16>
    %c1_i32 = arith.constant 1 : i32
    %6 = arith.addi %0, %c1_i32 : i32
    %7 = arith.index_cast %6 : i32 to index
    %c0_4 = arith.constant 0 : index
    %c0_5 = arith.constant 0 : index
    %c0_6 = arith.constant 0 : index
    %8 = vector.load %arg1[%7, %c0_4, %c0_5, %c0_6] : memref<6x2x8x16xbf16, #tpu.memory_space<vmem>>, vector<3x2x8x16xbf16>
    %9 = vector.shape_cast %8 : vector<3x2x8x16xbf16> to vector<48x16xbf16>
    %10 = tpu.concatenate %5, %9 in 1 : vector<48x16xbf16>, vector<48x16xbf16> -> vector<48x32xbf16>
    %c0_7 = arith.constant 0 : index
    %c0_8 = arith.constant 0 : index
    %c0_9 = arith.constant 0 : index
    %11 = vector.load %arg3[%c0_7, %c0_8, %c0_9] : memref<1x32x128xbf16, #tpu.memory_space<vmem>>, vector<1x32x128xbf16>
    %12 = vector.shape_cast %11 : vector<1x32x128xbf16> to vector<32x128xbf16>
    %c0_10 = arith.constant 0 : index
    %c0_11 = arith.constant 0 : index
    %c0_12 = arith.constant 0 : index
    %13 = vector.load %arg4[%c0_10, %c0_11, %c0_12] : memref<1x1x128xf32, #tpu.memory_space<vmem>>, vector<1x1x128xf32>
    %14 = vector.shape_cast %13 : vector<1x1x128xf32> to vector<1x128xf32>
    %cst = arith.constant dense<0.000000e+00> : vector<48x32xf32>
    %15 = tpu.matmul %1, %10, %cst {dimension_numbers = #tpu.dot_dimension_numbers<[1], [0], [0], [1], [0, 0, 1, 1], [], []>} : vector<48x48xbf16>, vector<48x32xbf16>, vector<48x32xf32> -> vector<48x32xf32>
    %16 = arith.truncf %15 : vector<48x32xf32> to vector<48x32xbf16>
    %cst_13 = arith.constant dense<0.000000e+00> : vector<48x128xf32>
    %17 = tpu.matmul %16, %12, %cst_13 {dimension_numbers = #tpu.dot_dimension_numbers<[1], [0], [0], [1], [0, 0, 1, 1], [], []>} : vector<48x32xbf16>, vector<32x128xbf16>, vector<48x128xf32> -> vector<48x128xf32>
    %18 = vector.broadcast %14 : vector<1x128xf32> to vector<48x128xf32>
    %19 = arith.addf %17, %18 : vector<48x128xf32>
    %20 = vector.extract_strided_slice %19 {offsets = [0, 0], sizes = [48, 64], strides = [1, 1]} : vector<48x128xf32> to vector<48x64xf32>
    %21 = vector.extract_strided_slice %19 {offsets = [0, 64], sizes = [48, 64], strides = [1, 1]} : vector<48x128xf32> to vector<48x64xf32>
    %22 = arith.negf %21 : vector<48x64xf32>
    %23 = math.exp %22 : vector<48x64xf32>
    %cst_14 = arith.constant 1.000000e+00 : f32
    %24 = vector.broadcast %cst_14 : f32 to vector<48x64xf32>
    %25 = arith.addf %24, %23 : vector<48x64xf32>
    %26 = arith.divf %24, %25 : vector<48x64xf32>
    %27 = arith.mulf %20, %26 : vector<48x64xf32>
    %28 = vector.extract_strided_slice %27 {offsets = [16, 0], sizes = [16, 64], strides = [1, 1]} : vector<48x64xf32> to vector<16x64xf32>
    %c0_15 = arith.constant 0 : index
    %c0_16 = arith.constant 0 : index
    %c0_17 = arith.constant 0 : index
    %29 = vector.load %arg5[%c0_15, %c0_16, %c0_17] : memref<1x64x128xbf16, #tpu.memory_space<vmem>>, vector<1x64x128xbf16>
    %30 = vector.shape_cast %29 : vector<1x64x128xbf16> to vector<64x128xbf16>
    %c0_18 = arith.constant 0 : index
    %c0_19 = arith.constant 0 : index
    %c0_20 = arith.constant 0 : index
    %31 = vector.load %arg6[%c0_18, %c0_19, %c0_20] : memref<1x1x128xf32, #tpu.memory_space<vmem>>, vector<1x1x128xf32>
    %32 = vector.shape_cast %31 : vector<1x1x128xf32> to vector<1x128xf32>
    %33 = arith.truncf %27 : vector<48x64xf32> to vector<48x64xbf16>
    %cst_21 = arith.constant dense<0.000000e+00> : vector<48x64xf32>
    %34 = tpu.matmul %1, %33, %cst_21 {dimension_numbers = #tpu.dot_dimension_numbers<[1], [0], [0], [1], [0, 0, 1, 1], [], []>} : vector<48x48xbf16>, vector<48x64xbf16>, vector<48x64xf32> -> vector<48x64xf32>
    %35 = arith.truncf %34 : vector<48x64xf32> to vector<48x64xbf16>
    %cst_22 = arith.constant dense<0.000000e+00> : vector<48x128xf32>
    %36 = tpu.matmul %35, %30, %cst_22 {dimension_numbers = #tpu.dot_dimension_numbers<[1], [0], [0], [1], [0, 0, 1, 1], [], []>} : vector<48x64xbf16>, vector<64x128xbf16>, vector<48x128xf32> -> vector<48x128xf32>
    %37 = vector.broadcast %32 : vector<1x128xf32> to vector<48x128xf32>
    %38 = arith.addf %36, %37 : vector<48x128xf32>
    %39 = vector.extract_strided_slice %38 {offsets = [0, 0], sizes = [48, 64], strides = [1, 1]} : vector<48x128xf32> to vector<48x64xf32>
    %40 = vector.extract_strided_slice %38 {offsets = [0, 64], sizes = [48, 64], strides = [1, 1]} : vector<48x128xf32> to vector<48x64xf32>
    %41 = arith.negf %40 : vector<48x64xf32>
    %42 = math.exp %41 : vector<48x64xf32>
    %cst_23 = arith.constant 1.000000e+00 : f32
    %43 = vector.broadcast %cst_23 : f32 to vector<48x64xf32>
    %44 = arith.addf %43, %42 : vector<48x64xf32>
    %45 = arith.divf %43, %44 : vector<48x64xf32>
    %46 = arith.mulf %39, %45 : vector<48x64xf32>
    %47 = vector.extract_strided_slice %46 {offsets = [16, 0], sizes = [16, 64], strides = [1, 1]} : vector<48x64xf32> to vector<16x64xf32>
    %48 = arith.maximumf %28, %47 : vector<16x64xf32>
    %49 = arith.index_cast %0 : i32 to index
    %c0_24 = arith.constant 0 : index
    %c0_25 = arith.constant 0 : index
    %c0_26 = arith.constant 0 : index
    %50 = vector.load %arg1[%49, %c0_24, %c0_25, %c0_26] : memref<6x2x8x16xbf16, #tpu.memory_space<vmem>>, vector<2x2x8x16xbf16>
    %51 = vector.shape_cast %50 : vector<2x2x8x16xbf16> to vector<32x16xbf16>
    %c2_i32_27 = arith.constant 2 : i32
    %52 = arith.addi %0, %c2_i32_27 : i32
    %53 = arith.index_cast %52 : i32 to index
    %c0_28 = arith.constant 0 : index
    %c0_29 = arith.constant 0 : index
    %c0_30 = arith.constant 0 : index
    %54 = vector.load %arg1[%53, %c0_28, %c0_29, %c0_30] : memref<6x2x8x16xbf16, #tpu.memory_space<vmem>>, vector<2x2x8x16xbf16>
    %55 = vector.shape_cast %54 : vector<2x2x8x16xbf16> to vector<32x16xbf16>
    %c0_31 = arith.constant 0 : index
    %c0_32 = arith.constant 0 : index
    %c0_33 = arith.constant 0 : index
    %56 = vector.load %arg7[%c0_31, %c0_32, %c0_33] : memref<2x16x32xbf16, #tpu.memory_space<vmem>>, vector<1x16x32xbf16>
    %57 = vector.shape_cast %56 : vector<1x16x32xbf16> to vector<16x32xbf16>
    %cst_34 = arith.constant dense<0.000000e+00> : vector<32x32xf32>
    %58 = tpu.matmul %51, %57, %cst_34 {dimension_numbers = #tpu.dot_dimension_numbers<[1], [0], [0], [1], [0, 0, 1, 1], [], []>} : vector<32x16xbf16>, vector<16x32xbf16>, vector<32x32xf32> -> vector<32x32xf32>
    %c1 = arith.constant 1 : index
    %c0_35 = arith.constant 0 : index
    %c0_36 = arith.constant 0 : index
    %59 = vector.load %arg7[%c1, %c0_35, %c0_36] : memref<2x16x32xbf16, #tpu.memory_space<vmem>>, vector<1x16x32xbf16>
    %60 = vector.shape_cast %59 : vector<1x16x32xbf16> to vector<16x32xbf16>
    %cst_37 = arith.constant dense<0.000000e+00> : vector<32x32xf32>
    %61 = tpu.matmul %55, %60, %cst_37 {dimension_numbers = #tpu.dot_dimension_numbers<[1], [0], [0], [1], [0, 0, 1, 1], [], []>} : vector<32x16xbf16>, vector<16x32xbf16>, vector<32x32xf32> -> vector<32x32xf32>
    %62 = arith.addf %58, %61 : vector<32x32xf32>
    %c0_38 = arith.constant 0 : index
    %c0_39 = arith.constant 0 : index
    %63 = vector.load %arg8[%c0_38, %c0_39] : memref<1x32xf32, #tpu.memory_space<vmem>>, vector<1x32xf32>
    %64 = vector.broadcast %63 : vector<1x32xf32> to vector<32x32xf32>
    %65 = arith.addf %62, %64 : vector<32x32xf32>
    %66 = vector.extract_strided_slice %48 {offsets = [0, 0], sizes = [16, 32], strides = [1, 1]} : vector<16x64xf32> to vector<16x32xf32>
    %67 = vector.extract_strided_slice %65 {offsets = [0, 0], sizes = [16, 32], strides = [1, 1]} : vector<32x32xf32> to vector<16x32xf32>
    %68 = arith.addf %66, %67 : vector<16x32xf32>
    %69 = vector.shape_cast %68 : vector<16x32xf32> to vector<2x1x8x32xf32>
    %c0_40 = arith.constant 0 : index
    %c0_41 = arith.constant 0 : index
    %c0_42 = arith.constant 0 : index
    %c0_43 = arith.constant 0 : index
    %70 = vector.load %arg9[%c0_40, %c0_41, %c0_42, %c0_43] : memref<2x2x8x32xf32, #tpu.memory_space<vmem>>, vector<2x1x8x32xf32>
    tpu.vector_store %arg9[%c0_40, %c0_41, %c0_42, %c0_43], %69 {strides = array<i32>} : memref<2x2x8x32xf32, #tpu.memory_space<vmem>>, vector<2x1x8x32xf32>,
    %71 = vector.extract_strided_slice %48 {offsets = [0, 32], sizes = [16, 32], strides = [1, 1]} : vector<16x64xf32> to vector<16x32xf32>
    %72 = vector.extract_strided_slice %65 {offsets = [16, 0], sizes = [16, 32], strides = [1, 1]} : vector<32x32xf32> to vector<16x32xf32>
    %73 = arith.addf %71, %72 : vector<16x32xf32>
    %74 = vector.shape_cast %73 : vector<16x32xf32> to vector<2x1x8x32xf32>
    %c0_44 = arith.constant 0 : index
    %c1_45 = arith.constant 1 : index
    %c0_46 = arith.constant 0 : index
    %c0_47 = arith.constant 0 : index
    %75 = vector.load %arg9[%c0_44, %c1_45, %c0_46, %c0_47] : memref<2x2x8x32xf32, #tpu.memory_space<vmem>>, vector<2x1x8x32xf32>
    tpu.vector_store %arg9[%c0_44, %c1_45, %c0_46, %c0_47], %74 {strides = array<i32>} : memref<2x2x8x32xf32, #tpu.memory_space<vmem>>, vector<2x1x8x32xf32>,
    return
  }
  func.func @transform_0(%arg0: i32) -> (i32, i32, i32, i32) {
    %c0_i32 = arith.constant 0 : i32
    %c0_i32_0 = arith.constant 0 : i32
    %c0_i32_1 = arith.constant 0 : i32
    %c0_i32_2 = arith.constant 0 : i32
    %c0_i32_3 = arith.constant 0 : i32
    return %c0_i32, %c0_i32_0, %c0_i32_1, %c0_i32_2 : i32, i32, i32, i32
  }
  func.func @transform_1(%arg0: i32) -> (i32, i32) {
    %c0_i32 = arith.constant 0 : i32
    %c0_i32_0 = arith.constant 0 : i32
    %c0_i32_1 = arith.constant 0 : i32
    return %c0_i32, %c0_i32_0 : i32, i32
  }
  func.func @transform_2(%arg0: i32) -> (i32, i32, i32) {
    %c0_i32 = arith.constant 0 : i32
    %c0_i32_0 = arith.constant 0 : i32
    %c0_i32_1 = arith.constant 0 : i32
    return %arg0, %c0_i32, %c0_i32_0 : i32, i32, i32
  }
  func.func @transform_3(%arg0: i32) -> (i32, i32, i32) {
    %c0_i32 = arith.constant 0 : i32
    %c0_i32_0 = arith.constant 0 : i32
    %c0_i32_1 = arith.constant 0 : i32
    return %arg0, %c0_i32, %c0_i32_0 : i32, i32, i32
  }
  func.func @transform_4(%arg0: i32) -> (i32, i32, i32) {
    %c0_i32 = arith.constant 0 : i32
    %c0_i32_0 = arith.constant 0 : i32
    %c0_i32_1 = arith.constant 0 : i32
    return %arg0, %c0_i32, %c0_i32_0 : i32, i32, i32
  }
  func.func @transform_5(%arg0: i32) -> (i32, i32, i32) {
    %c0_i32 = arith.constant 0 : i32
    %c0_i32_0 = arith.constant 0 : i32
    %c0_i32_1 = arith.constant 0 : i32
    return %arg0, %c0_i32, %c0_i32_0 : i32, i32, i32
  }
  func.func @transform_6(%arg0: i32) -> (i32, i32, i32) {
    %c0_i32 = arith.constant 0 : i32
    %c0_i32_0 = arith.constant 0 : i32
    %c0_i32_1 = arith.constant 0 : i32
    %c0_i32_2 = arith.constant 0 : i32
    return %c0_i32, %c0_i32_0, %c0_i32_1 : i32, i32, i32
  }
  func.func @transform_7(%arg0: i32) -> (i32, i32) {
    %c0_i32 = arith.constant 0 : i32
    %c0_i32_0 = arith.constant 0 : i32
    %c0_i32_1 = arith.constant 0 : i32
    return %c0_i32, %c0_i32_0 : i32, i32
  }
  func.func @transform_8(%arg0: i32) -> (i32, i32, i32, i32) {
    %c0_i32 = arith.constant 0 : i32
    %c0_i32_0 = arith.constant 0 : i32
    %c0_i32_1 = arith.constant 0 : i32
    %c0_i32_2 = arith.constant 0 : i32
    return %c0_i32, %arg0, %c0_i32_0, %c0_i32_1 : i32, i32, i32, i32
  }
}

</mosaic_0001>

<llo_original>
// kernel: tpu_custom_call.1
$region0: #{tpu_custom_call.1}
  #allocation0 [shape = 'u32[]', space=smem, size = 0x4, offset = 0x4, fixed_abs, tag = 'smem constant byte address 0x4 - core index']
  #allocation1 [shape = 'u32[144,128]{1,0:T(1,128)}', space=vmem, size = 0x12000, scoped, tag = 'internal scratch']
  #allocation11 [shape = 's32[]', space=sflag, size = 0x4, offset = 0, fixed_abs, tag = 'sflag constant byte address 0x0 - dummy sync flag']
  %s0 = inlined_call_operand.hbm [shape: bf16[6,2,8,16], index: 0, kind: input, shape index: {}]
  %s1 = inlined_call_operand.hbm [shape: bf16[48,48], index: 1, kind: input, shape index: {}]
  %s2 = inlined_call_operand.hbm [shape: bf16[2,32,128], index: 2, kind: input, shape index: {}]
  %s3 = inlined_call_operand.vmem [shape: f32[2,1,128], index: 3, kind: input, shape index: {}]
  %s4 = inlined_call_operand.hbm [shape: bf16[2,64,128], index: 4, kind: input, shape index: {}]
  %s5 = inlined_call_operand.vmem [shape: f32[2,1,128], index: 5, kind: input, shape index: {}]
  %s6 = inlined_call_operand.hbm [shape: bf16[2,16,32], index: 6, kind: input, shape index: {}]
  %s7 = inlined_call_operand.vmem [shape: f32[1,32], index: 7, kind: input, shape index: {}]
  %s8 = inlined_call_operand.hbm [shape: f32[2,4,8,32], index: 8, kind: output, shape index: {}]
  %s9 = sld [smem:[#allocation0]]
  $region85: #{tpu_custom_call.1} parent=0
    _
  %s11 = ssub.s32 1, %s9
  %s12 = scalar_select 0, %s11, %s9
  $region1: #{tpu_custom_call.1} parent=0
    #allocation2 [shape = 'u8[24576]{0}', space=vmem, size = 0x6000, scoped, tag = 'input window, operand 0, single buffered']
    #allocation3 [shape = 's32[2]{0}', space=sflag, size = 0x8, scoped, tag = 'scoped memory for tpu_custom_call.1']
    #allocation4 [shape = 's32[2]{0}', space=sflag, size = 0x8, scoped, tag = 'scoped memory for tpu_custom_call.1']
    #allocation5 [shape = 'u8[12288]{0}', space=vmem, size = 0x3000, scoped, tag = 'input window, operand 1, single buffered']
    #allocation6 [shape = 's32[1]{0}', space=sflag, size = 0x4, scoped, tag = 'scoped memory for tpu_custom_call.1']
    #allocation7 [shape = 'u8[16384]{0}', space=vmem, size = 0x4000, scoped, tag = 'input window, operand 2']
    #allocation8 [shape = 'u8[32768]{0}', space=vmem, size = 0x8000, scoped, tag = 'input window, operand 4']
    #allocation9 [shape = 'u8[8192]{0}', space=vmem, size = 0x2000, scoped, tag = 'input window, operand 6, single buffered']
    #allocation10 [shape = 'u8[32768]{0}', space=vmem, size = 0x8000, scoped, tag = 'output window, operand 0']
    %13 = vsyncpa [#allocation3], 0
    %14 = vsyncpa [#allocation6], 0
    %15 = vsyncpa [#allocation4], 0
    %s16 = scalar_lea.sflag [#allocation4], 1
    %17 = vsyncpa %s16, 0
    loop: start=0, step=1, limit=4
    $region2: #{tpu_custom_call.1} parent=1 // loop_pre_header
      _
    $region3: #{tpu_custom_call.1} parent=1 // loop_header
      %s19 = sphi 0, %s23
      %p20 = scmp.ge.s32.totalorder %s19, 4
      %s27 = sphi 0, %s27
      %s29 = sphi 0, %s27
      %s30 = sphi 0, %s29
      %s44 = sphi 0, %s30
      %s48 = sphi 0, %s48
      %s50 = sphi 0, %s48
      %s51 = sphi 0, %s50
      %s65 = sphi 0, %s51
      %s71 = sphi 0, %s73
      %s74 = sphi 0, %s71
      %s75 = sphi 0, %s74
      %s91 = sphi 0, %s75
      %s97 = sphi 0, %s99
      %s100 = sphi 0, %s97
      %s101 = sphi 0, %s100
      %s117 = sphi 0, %s101
      %s123 = sphi 0, %s125
      %s126 = sphi 0, %s123
      %s127 = sphi 0, %s126
      %s143 = sphi 0, %s127
      %s149 = sphi 0, %s151
      %s152 = sphi 0, %s149
      %s153 = sphi 0, %s152
      %s169 = sphi 0, %s153
      %s173 = sphi 0, %s173
      %s175 = sphi 0, %s173
      %s176 = sphi 0, %s175
      %s190 = sphi 0, %s176
      %s194 = sphi 0, %s194
      %s196 = sphi 0, %s194
      %s197 = sphi 0, %s196
      %s211 = sphi 0, %s197
      %s217 = sphi 0, %s219
      %s220 = sphi 0, %s217
      %s221 = sphi 0, %s220
      %s237 = sphi 0, %s221
    $region4: #{tpu_custom_call.1} parent=1 // loop_header_branch
      %22 = sbr.rel (%p20) target = $region8
    $region5: #{tpu_custom_call.1} parent=1 // loop_body
      %s24 = ssub.s32 %s19, 1
      %s25 = ssub.s32 %s19, 2
      %s26 = sadd.s32 %s19, 1
      %s28 = sadd.s32 %s27, 1
      %p31 = scmp.eq.s32.totalorder %s19, 1
      %p32 = scmp.ne.s32.totalorder %s27, %s29
      %p33 = scmp.eq.s32.totalorder %s19, 0
      %p34 = por %p32, %p33
      %p35 = scmp.ne.s32.totalorder %s27, %s29
      %p36 = scmp.eq.s32.totalorder %s24, 1
      %p37 = por %p35, %p36
      %p38 = scmp.ne.s32.totalorder %s29, %s30
      %p39 = scmp.eq.s32.totalorder %s24, 0
      %p40 = por %p38, %p39
      %p41 = scmp.ne.s32.totalorder %s29, %s30
      %p42 = scmp.eq.s32.totalorder %s25, 1
      %p43 = por %p41, %p42
      %p45 = scmp.ne.s32.totalorder %s30, %s44
      %p46 = scmp.eq.s32.totalorder %s25, 0
      %p47 = por %p45, %p46
      %s49 = sadd.s32 %s48, 1
      %p52 = scmp.eq.s32.totalorder %s19, 1
      %p53 = scmp.ne.s32.totalorder %s48, %s50
      %p54 = scmp.eq.s32.totalorder %s19, 0
      %p55 = por %p53, %p54
      %p56 = scmp.ne.s32.totalorder %s48, %s50
      %p57 = scmp.eq.s32.totalorder %s24, 1
      %p58 = por %p56, %p57
      %p59 = scmp.ne.s32.totalorder %s50, %s51
      %p60 = scmp.eq.s32.totalorder %s24, 0
      %p61 = por %p59, %p60
      %p62 = scmp.ne.s32.totalorder %s50, %s51
      %p63 = scmp.eq.s32.totalorder %s25, 1
      %p64 = por %p62, %p63
      %p66 = scmp.ne.s32.totalorder %s51, %s65
      %p67 = scmp.eq.s32.totalorder %s25, 0
      %p68 = por %p66, %p67
      %s69 = ssub.s32 %s19, %s26
      %p70 = scmp.eq.s32.totalorder %s69, 0
      %s72 = sadd.s32 %s71, 1
      %s73 = scalar_select %p70, %s71, %s72
      %p76 = pneg %p70
      %p77 = scmp.eq.s32.totalorder %s19, 1
      %p78 = por %p76, %p77
      %p79 = scmp.ne.s32.totalorder %s71, %s74
      %p80 = scmp.eq.s32.totalorder %s19, 0
      %p81 = por %p79, %p80
      %p82 = scmp.ne.s32.totalorder %s71, %s74
      %p83 = scmp.eq.s32.totalorder %s24, 1
      %p84 = por %p82, %p83
      %p85 = scmp.ne.s32.totalorder %s74, %s75
      %p86 = scmp.eq.s32.totalorder %s24, 0
      %p87 = por %p85, %p86
      %p88 = scmp.ne.s32.totalorder %s74, %s75
      %p89 = scmp.eq.s32.totalorder %s25, 1
      %p90 = por %p88, %p89
      %p92 = scmp.ne.s32.totalorder %s75, %s91
      %p93 = scmp.eq.s32.totalorder %s25, 0
      %p94 = por %p92, %p93
      %s95 = ssub.s32 %s19, %s26
      %p96 = scmp.eq.s32.totalorder %s95, 0
      %s98 = sadd.s32 %s97, 1
      %s99 = scalar_select %p96, %s97, %s98
      %p102 = pneg %p96
      %p103 = scmp.eq.s32.totalorder %s19, 1
      %p104 = por %p102, %p103
      %p105 = scmp.ne.s32.totalorder %s97, %s100
      %p106 = scmp.eq.s32.totalorder %s19, 0
      %p107 = por %p105, %p106
      %p108 = scmp.ne.s32.totalorder %s97, %s100
      %p109 = scmp.eq.s32.totalorder %s24, 1
      %p110 = por %p108, %p109
      %p111 = scmp.ne.s32.totalorder %s100, %s101
      %p112 = scmp.eq.s32.totalorder %s24, 0
      %p113 = por %p111, %p112
      %p114 = scmp.ne.s32.totalorder %s100, %s101
      %p115 = scmp.eq.s32.totalorder %s25, 1
      %p116 = por %p114, %p115
      %p118 = scmp.ne.s32.totalorder %s101, %s117
      %p119 = scmp.eq.s32.totalorder %s25, 0
      %p120 = por %p118, %p119
      %s121 = ssub.s32 %s19, %s26
      %p122 = scmp.eq.s32.totalorder %s121, 0
      %s124 = sadd.s32 %s123, 1
      %s125 = scalar_select %p122, %s123, %s124
      %p128 = pneg %p122
      %p129 = scmp.eq.s32.totalorder %s19, 1
      %p130 = por %p128, %p129
      %p131 = scmp.ne.s32.totalorder %s123, %s126
      %p132 = scmp.eq.s32.totalorder %s19, 0
      %p133 = por %p131, %p132
      %p134 = scmp.ne.s32.totalorder %s123, %s126
      %p135 = scmp.eq.s32.totalorder %s24, 1
      %p136 = por %p134, %p135
      %p137 = scmp.ne.s32.totalorder %s126, %s127
      %p138 = scmp.eq.s32.totalorder %s24, 0
      %p139 = por %p137, %p138
      %p140 = scmp.ne.s32.totalorder %s126, %s127
      %p141 = scmp.eq.s32.totalorder %s25, 1
      %p142 = por %p140, %p141
      %p144 = scmp.ne.s32.totalorder %s127, %s143
      %p145 = scmp.eq.s32.totalorder %s25, 0
      %p146 = por %p144, %p145
      %s147 = ssub.s32 %s19, %s26
      %p148 = scmp.eq.s32.totalorder %s147, 0
      %s150 = sadd.s32 %s149, 1
      %s151 = scalar_select %p148, %s149, %s150
      %p154 = pneg %p148
      %p155 = scmp.eq.s32.totalorder %s19, 1
      %p156 = por %p154, %p155
      %p157 = scmp.ne.s32.totalorder %s149, %s152
      %p158 = scmp.eq.s32.totalorder %s19, 0
      %p159 = por %p157, %p158
      %p160 = scmp.ne.s32.totalorder %s149, %s152
      %p161 = scmp.eq.s32.totalorder %s24, 1
      %p162 = por %p160, %p161
      %p163 = scmp.ne.s32.totalorder %s152, %s153
      %p164 = scmp.eq.s32.totalorder %s24, 0
      %p165 = por %p163, %p164
      %p166 = scmp.ne.s32.totalorder %s152, %s153
      %p167 = scmp.eq.s32.totalorder %s25, 1
      %p168 = por %p166, %p167
      %p170 = scmp.ne.s32.totalorder %s153, %s169
      %p171 = scmp.eq.s32.totalorder %s25, 0
      %p172 = por %p170, %p171
      %s174 = sadd.s32 %s173, 1
      %p177 = scmp.eq.s32.totalorder %s19, 1
      %p178 = scmp.ne.s32.totalorder %s173, %s175
      %p179 = scmp.eq.s32.totalorder %s19, 0
      %p180 = por %p178, %p179
      %p181 = scmp.ne.s32.totalorder %s173, %s175
      %p182 = scmp.eq.s32.totalorder %s24, 1
      %p183 = por %p181, %p182
      %p184 = scmp.ne.s32.totalorder %s175, %s176
      %p185 = scmp.eq.s32.totalorder %s24, 0
      %p186 = por %p184, %p185
      %p187 = scmp.ne.s32.totalorder %s175, %s176
      %p188 = scmp.eq.s32.totalorder %s25, 1
      %p189 = por %p187, %p188
      %p191 = scmp.ne.s32.totalorder %s176, %s190
      %p192 = scmp.eq.s32.totalorder %s25, 0
      %p193 = por %p191, %p192
      %s195 = sadd.s32 %s194, 1
      %p198 = scmp.eq.s32.totalorder %s19, 1
      %p199 = scmp.ne.s32.totalorder %s194, %s196
      %p200 = scmp.eq.s32.totalorder %s19, 0
      %p201 = por %p199, %p200
      %p202 = scmp.ne.s32.totalorder %s194, %s196
      %p203 = scmp.eq.s32.totalorder %s24, 1
      %p204 = por %p202, %p203
      %p205 = scmp.ne.s32.totalorder %s196, %s197
      %p206 = scmp.eq.s32.totalorder %s24, 0
      %p207 = por %p205, %p206
      %p208 = scmp.ne.s32.totalorder %s196, %s197
      %p209 = scmp.eq.s32.totalorder %s25, 1
      %p210 = por %p208, %p209
      %p212 = scmp.ne.s32.totalorder %s197, %s211
      %p213 = scmp.eq.s32.totalorder %s25, 0
      %p214 = por %p212, %p213
      %s215 = ssub.s32 %s19, %s26
      %p216 = scmp.eq.s32.totalorder %s215, 0
      %s218 = sadd.s32 %s217, 1
      %s219 = scalar_select %p216, %s217, %s218
      %p222 = pneg %p216
      %p223 = scmp.eq.s32.totalorder %s19, 1
      %p224 = por %p222, %p223
      %p225 = scmp.ne.s32.totalorder %s217, %s220
      %p226 = scmp.eq.s32.totalorder %s19, 0
      %p227 = por %p225, %p226
      %p228 = scmp.ne.s32.totalorder %s217, %s220
      %p229 = scmp.eq.s32.totalorder %s24, 1
      %p230 = por %p228, %p229
      %p231 = scmp.ne.s32.totalorder %s220, %s221
      %p232 = scmp.eq.s32.totalorder %s24, 0
      %p233 = por %p231, %p232
      %p234 = scmp.ne.s32.totalorder %s220, %s221
      %p235 = scmp.eq.s32.totalorder %s25, 1
      %p236 = por %p234, %p235
      %p238 = scmp.ne.s32.totalorder %s221, %s237
      %p239 = scmp.eq.s32.totalorder %s25, 0
      %p240 = por %p238, %p239
      %p241 = scmp.le.s32.totalorder 1, %s19
      %p242 = scmp.lt.s32.totalorder %s19, 3
      %p243 = pnand %p241, %p242
      %p244 = pneg %p243
      // Predicated region
      $region9: #{tpu_custom_call.1} parent=5 // pred_check
        _
      $region10: #{tpu_custom_call.1} parent=5 // pred_check_branch
        %246 = sbr.rel (%p243) target = $region12
      $region11: #{tpu_custom_call.1} parent=5 // pred_region
        %s247 = ssub.s32 %s19, 1
        // Predicated region
        $region13: #{tpu_custom_call.1} parent=11 // pred_check
          %p248 = pneg %p40
        $region14: #{tpu_custom_call.1} parent=11 // pred_check_branch
          %250 = sbr.rel (%p248) target = $region16
        $region15: #{tpu_custom_call.1} parent=11 // pred_region
          %s252 = ssub.s32 768, 768
          %253 = vsyncadd [#allocation3], %s252
          %s254 = sshll.u32 [#allocation2], 4
          %s255 = int_to_ptr.vmem [resolvable:$true] %s254
          %260 = dma.hbm_to_vmem [thread:$0]  %s0, 768, %s255, [#allocation3], 64, 64, 4
        $region16: #{tpu_custom_call.1} parent=11 // pred_fallthru
          _
        // Predicated region
        $region17: #{tpu_custom_call.1} parent=11 // pred_check
          %p261 = pneg %p61
        $region18: #{tpu_custom_call.1} parent=11 // pred_check_branch
          %263 = sbr.rel (%p261) target = $region20
        $region19: #{tpu_custom_call.1} parent=11 // pred_region
          %s265 = ssub.s32 384, 384
          %266 = vsyncadd [#allocation6], %s265
          %s267 = sshll.u32 [#allocation5], 4
          %s268 = int_to_ptr.vmem [resolvable:$true] %s267
          %273 = dma.hbm_to_vmem [thread:$0]  %s1, 384, %s268, [#allocation6], 64, 64, 4
        $region20: #{tpu_custom_call.1} parent=11 // pred_fallthru
          _
        // Predicated region
        $region21: #{tpu_custom_call.1} parent=11 // pred_check
          %p274 = pneg %p186
        $region22: #{tpu_custom_call.1} parent=11 // pred_check_branch
          %276 = sbr.rel (%p274) target = $region24
        $region23: #{tpu_custom_call.1} parent=11 // pred_region
          %s278 = ssub.s32 256, 256
          %279 = vsyncadd [#allocation6], %s278
          %s280 = sshll.u32 [#allocation9], 4
          %s281 = int_to_ptr.vmem [resolvable:$true] %s280
          %286 = dma.hbm_to_vmem [thread:$0]  %s6, 256, %s281, [#allocation6], 64, 64, 4
        $region24: #{tpu_custom_call.1} parent=11 // pred_fallthru
          _
        // Predicated region
        $region25: #{tpu_custom_call.1} parent=11 // pred_check
          %p287 = pneg %p207
        $region26: #{tpu_custom_call.1} parent=11 // pred_check_branch
          %289 = sbr.rel (%p287) target = $region28
        $region27: #{tpu_custom_call.1} parent=11 // pred_region
          _
        $region28: #{tpu_custom_call.1} parent=11 // pred_fallthru
          _
      $region12: #{tpu_custom_call.1} parent=5 // pred_fallthru
        _
      %p290 = scmp.lt.s32.totalorder %s19, 2
      // Predicated region
      $region29: #{tpu_custom_call.1} parent=5 // pred_check
        %p291 = pneg %p290
      $region30: #{tpu_custom_call.1} parent=5 // pred_check_branch
        %293 = sbr.rel (%p291) target = $region32
      $region31: #{tpu_custom_call.1} parent=5 // pred_region
        // Predicated region
        $region33: #{tpu_custom_call.1} parent=31 // pred_check
          %p294 = pneg %p81
        $region34: #{tpu_custom_call.1} parent=31 // pred_check_branch
          %296 = sbr.rel (%p294) target = $region36
        $region35: #{tpu_custom_call.1} parent=31 // pred_region
          %s297 = sand.u32 %s19, 1
          %s298 = scalar_lea.sflag [#allocation3], %s297
          %s299 = sand.u32 %s71, 1
          %s300 = smul.addr %s299, 16
          %s301 = scalar_lea.vmem [#allocation7], %s300
          %s303 = ssub.s32 256, 256
          %304 = vsyncadd %s298, %s303
          %s305 = smul.addr %s19, 4
          %s306 = smul.addr %s305, 64
          %s307 = scalar_lea.hbm %s2, %s306
          %s308 = sshll.u32 %s301, 4
          %s309 = int_to_ptr.vmem [resolvable:$true] %s308
          %314 = dma.hbm_to_vmem [thread:$0]  %s307, 256, %s309, %s298, 64, 64, 4
        $region36: #{tpu_custom_call.1} parent=31 // pred_fallthru
          _
        // Predicated region
        $region37: #{tpu_custom_call.1} parent=31 // pred_check
          %p315 = pneg %p107
        $region38: #{tpu_custom_call.1} parent=31 // pred_check_branch
          %317 = sbr.rel (%p315) target = $region40
        $region39: #{tpu_custom_call.1} parent=31 // pred_region
          %p318 = scmp.lt.s32.totalorder %s19, 1
          %s319 = scalar_select %p318, %s19, 1
          %s320 = scalar_lea.vmem %s3, %s319
        $region40: #{tpu_custom_call.1} parent=31 // pred_fallthru
          _
        // Predicated region
        $region41: #{tpu_custom_call.1} parent=31 // pred_check
          %p321 = pneg %p133
        $region42: #{tpu_custom_call.1} parent=31 // pred_check_branch
          %323 = sbr.rel (%p321) target = $region44
        $region43: #{tpu_custom_call.1} parent=31 // pred_region
          %s324 = sand.u32 %s19, 1
          %s325 = scalar_lea.sflag [#allocation3], %s324
          %s326 = sand.u32 %s123, 1
          %s327 = smul.addr %s326, 32
          %s328 = scalar_lea.vmem [#allocation8], %s327
          %s330 = ssub.s32 512, 512
          %331 = vsyncadd %s325, %s330
          %s332 = smul.addr %s19, 8
          %s333 = smul.addr %s332, 64
          %s334 = scalar_lea.hbm %s4, %s333
          %s335 = sshll.u32 %s328, 4
          %s336 = int_to_ptr.vmem [resolvable:$true] %s335
          %341 = dma.hbm_to_vmem [thread:$0]  %s334, 512, %s336, %s325, 64, 64, 4
        $region44: #{tpu_custom_call.1} parent=31 // pred_fallthru
          _
        // Predicated region
        $region45: #{tpu_custom_call.1} parent=31 // pred_check
          %p342 = pneg %p159
        $region46: #{tpu_custom_call.1} parent=31 // pred_check_branch
          %344 = sbr.rel (%p342) target = $region48
        $region47: #{tpu_custom_call.1} parent=31 // pred_region
          %p345 = scmp.lt.s32.totalorder %s19, 1
          %s346 = scalar_select %p345, %s19, 1
          %s347 = scalar_lea.vmem %s5, %s346
        $region48: #{tpu_custom_call.1} parent=31 // pred_fallthru
          _
      $region32: #{tpu_custom_call.1} parent=5 // pred_fallthru
        _
      %p348 = scmp.le.s32.totalorder 1, %s19
      %p349 = scmp.lt.s32.totalorder %s19, 3
      %p350 = pnand %p348, %p349
      %p351 = pneg %p350
      // Predicated region
      $region49: #{tpu_custom_call.1} parent=5 // pred_check
        _
      $region50: #{tpu_custom_call.1} parent=5 // pred_check_branch
        %353 = sbr.rel (%p350) target = $region52
      $region51: #{tpu_custom_call.1} parent=5 // pred_region
        %s354 = ssub.s32 %s19, 1
        // Predicated region
        $region53: #{tpu_custom_call.1} parent=51 // pred_check
          %p355 = pneg %p40
        $region54: #{tpu_custom_call.1} parent=51 // pred_check_branch
          %357 = sbr.rel (%p355) target = $region56
        $region55: #{tpu_custom_call.1} parent=51 // pred_region
          %358 = dma.done [#allocation3], 768
        $region56: #{tpu_custom_call.1} parent=51 // pred_fallthru
          _
        // Predicated region
        $region57: #{tpu_custom_call.1} parent=51 // pred_check
          %p359 = pneg %p61
        $region58: #{tpu_custom_call.1} parent=51 // pred_check_branch
          %361 = sbr.rel (%p359) target = $region60
        $region59: #{tpu_custom_call.1} parent=51 // pred_region
          %362 = dma.done [#allocation6], 384
        $region60: #{tpu_custom_call.1} parent=51 // pred_fallthru
          _
        %s363 = sand.u32 %s24, 1
        %s364 = scalar_lea.sflag [#allocation3], %s363
        %s365 = sand.u32 %s74, 1
        %s366 = smul.addr %s365, 16
        %s367 = scalar_lea.vmem [#allocation7], %s366
        // Predicated region
        $region61: #{tpu_custom_call.1} parent=51 // pred_check
          %p368 = pneg %p87
        $region62: #{tpu_custom_call.1} parent=51 // pred_check_branch
          %370 = sbr.rel (%p368) target = $region64
        $region63: #{tpu_custom_call.1} parent=51 // pred_region
          %371 = dma.done %s364, 256
        $region64: #{tpu_custom_call.1} parent=51 // pred_fallthru
          _
        %s372 = sand.u32 %s24, 1
        %s373 = scalar_lea.sflag [#allocation3], %s372
        %s374 = sand.u32 %s126, 1
        %s375 = smul.addr %s374, 32
        %s376 = scalar_lea.vmem [#allocation8], %s375
        // Predicated region
        $region65: #{tpu_custom_call.1} parent=51 // pred_check
          %p377 = pneg %p139
        $region66: #{tpu_custom_call.1} parent=51 // pred_check_branch
          %379 = sbr.rel (%p377) target = $region68
        $region67: #{tpu_custom_call.1} parent=51 // pred_region
          %380 = dma.done %s373, 512
        $region68: #{tpu_custom_call.1} parent=51 // pred_fallthru
          _
        // Predicated region
        $region69: #{tpu_custom_call.1} parent=51 // pred_check
          %p381 = pneg %p186
        $region70: #{tpu_custom_call.1} parent=51 // pred_check_branch
          %383 = sbr.rel (%p381) target = $region72
        $region71: #{tpu_custom_call.1} parent=51 // pred_region
          %384 = dma.done [#allocation6], 256
        $region72: #{tpu_custom_call.1} parent=51 // pred_fallthru
          _
        %p385 = pneg %p40
        %p386 = pneg %p37
        %p387 = pneg %p61
        %p388 = pneg %p58
        %s389 = sand.u32 %s24, 1
        %s390 = scalar_lea.sflag [#allocation3], %s389
        %s391 = sand.u32 %s74, 1
        %s392 = smul.addr %s391, 16
        %s393 = scalar_lea.vmem [#allocation7], %s392
        %p394 = pneg %p87
        %p395 = pneg %p84
        %p396 = scmp.lt.s32.totalorder %s24, 1
        %s397 = scalar_select %p396, %s24, 1
        %s398 = scalar_lea.vmem %s3, %s397
        %p399 = pneg %p113
        %p400 = pneg %p110
        %s401 = sand.u32 %s24, 1
        %s402 = scalar_lea.sflag [#allocation3], %s401
        %s403 = sand.u32 %s126, 1
        %s404 = smul.addr %s403, 32
        %s405 = scalar_lea.vmem [#allocation8], %s404
        %p406 = pneg %p139
        %p407 = pneg %p136
        %p408 = scmp.lt.s32.totalorder %s24, 1
        %s409 = scalar_select %p408, %s24, 1
        %s410 = scalar_lea.vmem %s5, %s409
        %p411 = pneg %p165
        %p412 = pneg %p162
        %p413 = pneg %p186
        %p414 = pneg %p183
        %p415 = pneg %p207
        %p416 = pneg %p204
        %p417 = pneg %p233
        %p418 = pneg %p230
        %s419 = sand.u32 %s220, 1
        %s420 = scalar_lea.sflag [#allocation4], %s419
        %s421 = sand.u32 %s220, 1
        %s422 = smul.addr %s421, 32
        %s423 = scalar_lea.vmem [#allocation10], %s422
        %p424 = scmp.lt.s32.totalorder %s24, 1
        %s425 = scalar_select %p424, %s24, 1
        %s426 = scalar_lea.vmem %s3, %s425
        %p427 = scmp.lt.s32.totalorder %s24, 1
        %s428 = scalar_select %p427, %s24, 1
        %s429 = scalar_lea.vmem %s5, %s428
        %s430 = smul.u32 2, %s24
        %s432 = smul.u32 %s24, 2
        %v433 = vld [vmem:[#allocation5] sm:$0xf]
        %v434 = vld [vmem:[#allocation5 + $0x4] sm:$0xf]
        %v435 = vld [vmem:[#allocation5 + $0x8] sm:$0xf]
        %v436 = vld [vmem:[#allocation5 + $0xc] sm:$0xf]
        %v437 = vld [vmem:[#allocation5 + $0x10] sm:$0xf]
        %v438 = vld [vmem:[#allocation5 + $0x14] sm:$0xf]
        %s439 = smul.u32 %s432, 2
        %s440 = smul.addr %s439, 4
        %s441 = scalar_lea.vmem [#allocation2], %s440
        %v442 = vld [vmem:[%s441] sm:$0xf]
        %v443 = vld [vmem:[%s441 + $0x4] sm:$0xf]
        %v444 = vld [vmem:[%s441 + $0x8] sm:$0xf]
        %v445 = vld [vmem:[%s441 + $0xc] sm:$0xf]
        %v446 = vld [vmem:[%s441 + $0x10] sm:$0xf]
        %v447 = vld [vmem:[%s441 + $0x14] sm:$0xf]
        %s448 = sadd.s32 %s432, 1
        %s449 = smul.u32 %s448, 2
        %s450 = smul.addr %s449, 4
        %s451 = scalar_lea.vmem [#allocation2], %s450
        %v452 = vld [vmem:[%s451] sm:$0xf]
        %v453 = vld [vmem:[%s451 + $0x4] sm:$0xf]
        %v454 = vld [vmem:[%s451 + $0x8] sm:$0xf]
        %v455 = vld [vmem:[%s451 + $0xc] sm:$0xf]
        %v456 = vld [vmem:[%s451 + $0x10] sm:$0xf]
        %v457 = vld [vmem:[%s451 + $0x14] sm:$0xf]
        %v464 = vunpack.c.l.b16 %v442
        %v465 = vunpack.c.l.b16 %v443
        %v466 = vunpack.c.l.b16 %v444
        %v467 = vunpack.c.l.b16 %v445
        %v468 = vunpack.c.l.b16 %v446
        %v469 = vunpack.c.l.b16 %v447
        %v470 = vpack.c.b16 %v465, %v464
        %v471 = vpack.c.b16 %v467, %v466
        %v472 = vpack.c.b16 %v469, %v468
        %v479 = vunpack.c.l.b16 %v452
        %v480 = vunpack.c.l.b16 %v453
        %v481 = vunpack.c.l.b16 %v454
        %v482 = vunpack.c.l.b16 %v455
        %v483 = vunpack.c.l.b16 %v456
        %v484 = vunpack.c.l.b16 %v457
        %v485 = vpack.c.b16 %v480, %v479
        %v486 = vpack.c.b16 %v482, %v481
        %v487 = vpack.c.b16 %v484, %v483
        %488 = vrot.lane.b32.xlu0 %v485, 16
        %v489 = vpop.permute.xlu0 %488
        %490 = vrot.lane.b32.xlu0 %v486, 16
        %v491 = vpop.permute.xlu0 %490
        %492 = vrot.lane.b32.xlu0 %v487, 16
        %v493 = vpop.permute.xlu0 %492
        %vm494 = vcmask 130048
        %v497 = vsel %vm494, %v470, %v489
        %v501 = vsel %vm494, %v471, %v491
        %v505 = vsel %vm494, %v472, %v493
        %v507 = vld [vmem:[%s367] sm:$0xf]
        %v508 = vld [vmem:[%s367 + $0x4] sm:$0xf]
        %v509 = vld [vmem:[%s367 + $0x8] sm:$0xf]
        %v510 = vld [vmem:[%s367 + $0xc] sm:$0xf]
        %v511 = vld [vmem:[%s426] sm:$0x1]
        %v518 = vunpack.c.l.b16 %v433
        %v519 = vunpack.c.l.b16 %v434
        %v520 = vunpack.c.l.b16 %v435
        %v521 = vunpack.c.l.b16 %v436
        %v522 = vunpack.c.l.b16 %v437
        %v523 = vunpack.c.l.b16 %v438
        %v524 = vpack.c.b16 %v519, %v518
        %v525 = vpack.c.b16 %v521, %v520
        %v526 = vpack.c.b16 %v523, %v522
        %vm527 = vcmask 392192
        %v529 = vsel %vm527, %v524, 0
        %v532 = vsel %vm527, %v525, 0
        %v535 = vsel %vm527, %v526, 0
        %537 = vmatprep.subr.bf16.mxu0 0
        %538 = vmatpush1.bf16.msra.mxu0 0
        %539 = vmatprep.subr.bf16.mxu0 0
        %540 = vmatpush1.bf16.msra.mxu0 0
        %541 = vmatprep.subr.bf16.mxu0 0
        %542 = vmatpush1.bf16.msra.mxu0 0
        %543 = vmatprep.subr.bf16.mxu0 0
        %544 = vmatpush1.bf16.msra.mxu0 0
        %545 = vmatprep.subr.bf16.mxu0 0
        %546 = vmatpush1.bf16.msra.mxu0 0
        %547 = vmatprep.subr.bf16.mxu0 0
        %548 = vmatpush1.bf16.msra.mxu0 %v505
        %549 = vmatprep.subr.bf16.mxu0 0
        %550 = vmatpush1.bf16.msra.mxu0 %v501
        %551 = vmatprep.subr.bf16.mxu0 0
        %552 = vmatpush1.bf16.msra.mxu0 %v497
        %553 = vmatprep.subr.bf16.mxu0 0
        %554 = vmatpush2.bf16.msra.mxu0 0
        %555 = vmatprep.subr.bf16.mxu0 0
        %556 = vmatpush2.bf16.msra.mxu0 0
        %557 = vmatprep.subr.bf16.mxu0 0
        %558 = vmatpush2.bf16.msra.mxu0 0
        %559 = vmatprep.subr.bf16.mxu0 0
        %560 = vmatpush2.bf16.msra.mxu0 0
        %561 = vmatprep.subr.bf16.mxu0 0
        %562 = vmatpush2.bf16.msra.mxu0 0
        %563 = vmatprep.subr.bf16.mxu0 0
        %564 = vmatpush2.bf16.msra.mxu0 0
        %565 = vmatprep.subr.bf16.mxu0 0
        %566 = vmatpush2.bf16.msra.mxu0 0
        %567 = vmatprep.subr.bf16.mxu0 0
        %568 = vmatpush2.bf16.msra.mxu0 0
        %569 = vmatprep.mubr.bf16.mxu0 0
        %570 = vmatmul.mubr.bf16.gmra.mxu0 %v529
        %v571 = vpop.f32.mrf.mxu0
        %v572 = vadd.f32 0.0, %v571
        %v573 = vpop.f32.mrf.mxu0
        %v574 = vpop.f32.mrf.mxu0
        %v575 = vadd.f32 0.0, %v574
        %v576 = vpop.f32.mrf.mxu0
        %577 = vmatprep.mubr.bf16.mxu0 0
        %578 = vmatmul.mubr.bf16.gmra.mxu0 %v532
        %v579 = vpop.f32.mrf.mxu0
        %v580 = vadd.f32 0.0, %v579
        %v581 = vpop.f32.mrf.mxu0
        %v582 = vpop.f32.mrf.mxu0
        %v583 = vadd.f32 0.0, %v582
        %v584 = vpop.f32.mrf.mxu0
        %585 = vmatprep.mubr.bf16.mxu0 0
        %586 = vmatmul.mubr.bf16.gmra.mxu0 %v535
        %v587 = vpop.f32.mrf.mxu0
        %v588 = vadd.f32 0.0, %v587
        %v589 = vpop.f32.mrf.mxu0
        %v590 = vpop.f32.mrf.mxu0
        %v591 = vadd.f32 0.0, %v590
        %v592 = vpop.f32.mrf.mxu0
        %593 = vdwg.mxu0
        %v594 = vpack.c.bf16 %v575, %v572
        %v595 = vpack.c.bf16 %v583, %v580
        %v596 = vpack.c.bf16 %v591, %v588
        %v598 = vlaneseq
        %v599 = vshrl.u32 %v598, 7
        %v600 = vsub.s32 0, %v599
        %v601 = vrot.slane %v511, %v600
        %v607 = vunpack.c.l.b16 %v507
        %v608 = vunpack.c.l.b16 %v508
        %v609 = vunpack.c.l.b16 %v509
        %v610 = vunpack.c.l.b16 %v510
        %v611 = vpack.c.b16 %v608, %v607
        %v612 = vpack.c.b16 %v610, %v609
        %vm615 = vcmask 261120
        %v617 = vsel %vm615, %v594, 0
        %v620 = vsel %vm615, %v595, 0
        %v623 = vsel %vm615, %v596, 0
        %625 = vmatprep.subr.bf16.mxu0 0
        %626 = vmatpush1.bf16.msra.mxu0 0
        %627 = vmatprep.subr.bf16.mxu0 0
        %628 = vmatpush1.bf16.msra.mxu0 0
        %629 = vmatprep.subr.bf16.mxu0 0
        %630 = vmatpush1.bf16.msra.mxu0 0
        %631 = vmatprep.subr.bf16.mxu0 0
        %632 = vmatpush1.bf16.msra.mxu0 0
        %633 = vmatprep.subr.bf16.mxu0 0
        %634 = vmatpush1.bf16.msra.mxu0 0
        %635 = vmatprep.subr.bf16.mxu0 0
        %636 = vmatpush1.bf16.msra.mxu0 0
        %637 = vmatprep.subr.bf16.mxu0 0
        %638 = vmatpush1.bf16.msra.mxu0 %v612
        %639 = vmatprep.subr.bf16.mxu0 0
        %640 = vmatpush1.bf16.msra.mxu0 %v611
        %641 = vmatprep.subr.bf16.mxu0 0
        %642 = vmatpush2.bf16.msra.mxu0 0
        %643 = vmatprep.subr.bf16.mxu0 0
        %644 = vmatpush2.bf16.msra.mxu0 0
        %645 = vmatprep.subr.bf16.mxu0 0
        %646 = vmatpush2.bf16.msra.mxu0 0
        %647 = vmatprep.subr.bf16.mxu0 0
        %648 = vmatpush2.bf16.msra.mxu0 0
        %649 = vmatprep.subr.bf16.mxu0 0
        %650 = vmatpush2.bf16.msra.mxu0 0
        %651 = vmatprep.subr.bf16.mxu0 0
        %652 = vmatpush2.bf16.msra.mxu0 0
        %653 = vmatprep.subr.bf16.mxu0 0
        %654 = vmatpush2.bf16.msra.mxu0 0
        %655 = vmatprep.subr.bf16.mxu0 0
        %656 = vmatpush2.bf16.msra.mxu0 0
        %657 = vmatprep.mubr.bf16.mxu0 0
        %658 = vmatmul.mubr.bf16.gmra.mxu0 %v617
        %v659 = vpop.f32.mrf.mxu0
        %v660 = vadd.f32 %v601, %v659
        %v661 = vpop.f32.mrf.mxu0
        %v662 = vpop.f32.mrf.mxu0
        %v663 = vadd.f32 %v601, %v662
        %v664 = vpop.f32.mrf.mxu0
        %665 = vmatprep.mubr.bf16.mxu0 0
        %666 = vmatmul.mubr.bf16.gmra.mxu0 %v620
        %v667 = vpop.f32.mrf.mxu0
        %v668 = vadd.f32 %v601, %v667
        %v669 = vpop.f32.mrf.mxu0
        %v670 = vpop.f32.mrf.mxu0
        %v671 = vadd.f32 %v601, %v670
        %v672 = vpop.f32.mrf.mxu0
        %673 = vmatprep.mubr.bf16.mxu0 0
        %674 = vmatmul.mubr.bf16.gmra.mxu0 %v623
        %v675 = vpop.f32.mrf.mxu0
        %v676 = vadd.f32 %v601, %v675
        %v677 = vpop.f32.mrf.mxu0
        %v678 = vpop.f32.mrf.mxu0
        %v679 = vadd.f32 %v601, %v678
        %v680 = vpop.f32.mrf.mxu0
        %681 = vdwg.mxu0
        %v682 = vxor.u32 %v660, 2147483648
        %v683 = vxor.u32 %v663, 2147483648
        %v684 = vxor.u32 %v668, 2147483648
        %v685 = vxor.u32 %v671, 2147483648
        %v686 = vxor.u32 %v676, 2147483648
        %v687 = vxor.u32 %v679, 2147483648
        %v688 = vmul.f32 %v682, 1.442695
        %v689 = vpow.pop %v688
        %v690 = vmul.f32 %v683, 1.442695
        %v691 = vpow.pop %v690
        %v692 = vmul.f32 %v684, 1.442695
        %v693 = vpow.pop %v692
        %v694 = vmul.f32 %v685, 1.442695
        %v695 = vpow.pop %v694
        %v696 = vmul.f32 %v686, 1.442695
        %v697 = vpow.pop %v696
        %v698 = vmul.f32 %v687, 1.442695
        %v699 = vpow.pop %v698
        %v700 = vadd.f32 %v689, 1.0
        %v701 = vadd.f32 %v691, 1.0
        %v702 = vadd.f32 %v693, 1.0
        %v703 = vadd.f32 %v695, 1.0
        %v704 = vadd.f32 %v697, 1.0
        %v705 = vadd.f32 %v699, 1.0
        %v706 = vrcp.pop %v700
        %v707 = vmul.f32 1.0, %v706
        %v708 = vrcp.pop %v701
        %v709 = vmul.f32 1.0, %v708
        %v710 = vrcp.pop %v702
        %v711 = vmul.f32 1.0, %v710
        %v712 = vrcp.pop %v703
        %v713 = vmul.f32 1.0, %v712
        %v714 = vrcp.pop %v704
        %v715 = vmul.f32 1.0, %v714
        %v716 = vrcp.pop %v705
        %v717 = vmul.f32 1.0, %v716
        %724 = vrot.lane.b32.xlu0 %v707, 64
        %v725 = vpop.permute.xlu0 %724
        %726 = vrot.lane.b32.xlu0 %v709, 64
        %v727 = vpop.permute.xlu0 %726
        %728 = vrot.lane.b32.xlu0 %v711, 64
        %v729 = vpop.permute.xlu0 %728
        %730 = vrot.lane.b32.xlu0 %v713, 64
        %v731 = vpop.permute.xlu0 %730
        %732 = vrot.lane.b32.xlu0 %v715, 64
        %v733 = vpop.permute.xlu0 %732
        %734 = vrot.lane.b32.xlu0 %v717, 64
        %v735 = vpop.permute.xlu0 %734
        %v742 = vmul.f32 %v660, %v725
        %v743 = vmul.f32 %v663, %v727
        %v744 = vmul.f32 %v668, %v729
        %v745 = vmul.f32 %v671, %v731
        %v746 = vmul.f32 %v676, %v733
        %v747 = vmul.f32 %v679, %v735
        %v748 = vld [vmem:[%s376] sm:$0xf]
        %v749 = vld [vmem:[%s376 + $0x4] sm:$0xf]
        %v750 = vld [vmem:[%s376 + $0x8] sm:$0xf]
        %v751 = vld [vmem:[%s376 + $0xc] sm:$0xf]
        %v752 = vld [vmem:[%s376 + $0x10] sm:$0xf]
        %v753 = vld [vmem:[%s376 + $0x14] sm:$0xf]
        %v754 = vld [vmem:[%s376 + $0x18] sm:$0xf]
        %v755 = vld [vmem:[%s376 + $0x1c] sm:$0xf]
        %v756 = vld [vmem:[%s429] sm:$0x1]
        %v757 = vpack.c.bf16 %v743, %v742
        %v758 = vpack.c.bf16 %v745, %v744
        %v759 = vpack.c.bf16 %v747, %v746
        %760 = vmatprep.subr.bf16.mxu0 0
        %761 = vmatpush1.bf16.msra.mxu0 0
        %762 = vmatprep.subr.bf16.mxu0 0
        %763 = vmatpush1.bf16.msra.mxu0 0
        %764 = vmatprep.subr.bf16.mxu0 0
        %765 = vmatpush1.bf16.msra.mxu0 0
        %766 = vmatprep.subr.bf16.mxu0 0
        %767 = vmatpush1.bf16.msra.mxu0 0
        %768 = vmatprep.subr.bf16.mxu0 0
        %769 = vmatpush1.bf16.msra.mxu0 0
        %770 = vmatprep.subr.bf16.mxu0 0
        %771 = vmatpush1.bf16.msra.mxu0 %v759
        %772 = vmatprep.subr.bf16.mxu0 0
        %773 = vmatpush1.bf16.msra.mxu0 %v758
        %774 = vmatprep.subr.bf16.mxu0 0
        %775 = vmatpush1.bf16.msra.mxu0 %v757
        %776 = vmatprep.subr.bf16.mxu0 0
        %777 = vmatpush2.bf16.msra.mxu0 0
        %778 = vmatprep.subr.bf16.mxu0 0
        %779 = vmatpush2.bf16.msra.mxu0 0
        %780 = vmatprep.subr.bf16.mxu0 0
        %781 = vmatpush2.bf16.msra.mxu0 0
        %782 = vmatprep.subr.bf16.mxu0 0
        %783 = vmatpush2.bf16.msra.mxu0 0
        %784 = vmatprep.subr.bf16.mxu0 0
        %785 = vmatpush2.bf16.msra.mxu0 0
        %786 = vmatprep.subr.bf16.mxu0 0
        %787 = vmatpush2.bf16.msra.mxu0 0
        %788 = vmatprep.subr.bf16.mxu0 0
        %789 = vmatpush2.bf16.msra.mxu0 0
        %790 = vmatprep.subr.bf16.mxu0 0
        %791 = vmatpush2.bf16.msra.mxu0 0
        %792 = vmatprep.mubr.bf16.mxu0 0
        %793 = vmatmul.mubr.bf16.gmra.mxu0 %v529
        %v794 = vpop.f32.mrf.mxu0
        %v795 = vadd.f32 0.0, %v794
        %v796 = vpop.f32.mrf.mxu0
        %v797 = vpop.f32.mrf.mxu0
        %v798 = vadd.f32 0.0, %v797
        %v799 = vpop.f32.mrf.mxu0
        %800 = vmatprep.mubr.bf16.mxu0 0
        %801 = vmatmul.mubr.bf16.gmra.mxu0 %v532
        %v802 = vpop.f32.mrf.mxu0
        %v803 = vadd.f32 0.0, %v802
        %v804 = vpop.f32.mrf.mxu0
        %v805 = vpop.f32.mrf.mxu0
        %v806 = vadd.f32 0.0, %v805
        %v807 = vpop.f32.mrf.mxu0
        %808 = vmatprep.mubr.bf16.mxu0 0
        %809 = vmatmul.mubr.bf16.gmra.mxu0 %v535
        %v810 = vpop.f32.mrf.mxu0
        %v811 = vadd.f32 0.0, %v810
        %v812 = vpop.f32.mrf.mxu0
        %v813 = vpop.f32.mrf.mxu0
        %v814 = vadd.f32 0.0, %v813
        %v815 = vpop.f32.mrf.mxu0
        %816 = vdwg.mxu0
        %v817 = vpack.c.bf16 %v798, %v795
        %v818 = vpack.c.bf16 %v806, %v803
        %v819 = vpack.c.bf16 %v814, %v811
        %v821 = vlaneseq
        %v822 = vshrl.u32 %v821, 7
        %v823 = vsub.s32 0, %v822
        %v824 = vrot.slane %v756, %v823
        %v834 = vunpack.c.l.b16 %v748
        %v835 = vunpack.c.l.b16 %v749
        %v836 = vunpack.c.l.b16 %v750
        %v837 = vunpack.c.l.b16 %v751
        %v838 = vunpack.c.l.b16 %v752
        %v839 = vunpack.c.l.b16 %v753
        %v840 = vunpack.c.l.b16 %v754
        %v841 = vunpack.c.l.b16 %v755
        %v842 = vpack.c.b16 %v835, %v834
        %v843 = vpack.c.b16 %v837, %v836
        %v844 = vpack.c.b16 %v839, %v838
        %v845 = vpack.c.b16 %v841, %v840
        %vm850 = vcmask 523264
        %v852 = vsel %vm850, %v817, 0
        %v855 = vsel %vm850, %v818, 0
        %v858 = vsel %vm850, %v819, 0
        %860 = vmatprep.subr.bf16.mxu0 0
        %861 = vmatpush1.bf16.msra.mxu0 0
        %862 = vmatprep.subr.bf16.mxu0 0
        %863 = vmatpush1.bf16.msra.mxu0 0
        %864 = vmatprep.subr.bf16.mxu0 0
        %865 = vmatpush1.bf16.msra.mxu0 0
        %866 = vmatprep.subr.bf16.mxu0 0
        %867 = vmatpush1.bf16.msra.mxu0 0
        %868 = vmatprep.subr.bf16.mxu0 0
        %869 = vmatpush1.bf16.msra.mxu0 %v845
        %870 = vmatprep.subr.bf16.mxu0 0
        %871 = vmatpush1.bf16.msra.mxu0 %v844
        %872 = vmatprep.subr.bf16.mxu0 0
        %873 = vmatpush1.bf16.msra.mxu0 %v843
        %874 = vmatprep.subr.bf16.mxu0 0
        %875 = vmatpush1.bf16.msra.mxu0 %v842
        %876 = vmatprep.subr.bf16.mxu0 0
        %877 = vmatpush2.bf16.msra.mxu0 0
        %878 = vmatprep.subr.bf16.mxu0 0
        %879 = vmatpush2.bf16.msra.mxu0 0
        %880 = vmatprep.subr.bf16.mxu0 0
        %881 = vmatpush2.bf16.msra.mxu0 0
        %882 = vmatprep.subr.bf16.mxu0 0
        %883 = vmatpush2.bf16.msra.mxu0 0
        %884 = vmatprep.subr.bf16.mxu0 0
        %885 = vmatpush2.bf16.msra.mxu0 0
        %886 = vmatprep.subr.bf16.mxu0 0
        %887 = vmatpush2.bf16.msra.mxu0 0
        %888 = vmatprep.subr.bf16.mxu0 0
        %889 = vmatpush2.bf16.msra.mxu0 0
        %890 = vmatprep.subr.bf16.mxu0 0
        %891 = vmatpush2.bf16.msra.mxu0 0
        %892 = vmatprep.mubr.bf16.mxu0 0
        %893 = vmatmul.mubr.bf16.gmra.mxu0 %v852
        %v894 = vpop.f32.mrf.mxu0
        %v895 = vpop.f32.mrf.mxu0
        %v896 = vpop.f32.mrf.mxu0
        %v897 = vpop.f32.mrf.mxu0
        %898 = vmatprep.mubr.bf16.mxu0 0
        %899 = vmatmul.mubr.bf16.gmra.mxu0 %v855
        %v900 = vpop.f32.mrf.mxu0
        %v901 = vadd.f32 %v824, %v900
        %v902 = vpop.f32.mrf.mxu0
        %v903 = vpop.f32.mrf.mxu0
        %v904 = vadd.f32 %v824, %v903
        %v905 = vpop.f32.mrf.mxu0
        %906 = vmatprep.mubr.bf16.mxu0 0
        %907 = vmatmul.mubr.bf16.gmra.mxu0 %v858
        %v908 = vpop.f32.mrf.mxu0
        %v909 = vpop.f32.mrf.mxu0
        %v910 = vpop.f32.mrf.mxu0
        %v911 = vpop.f32.mrf.mxu0
        %912 = vdwg.mxu0
        %v913 = vxor.u32 %v901, 2147483648
        %v914 = vxor.u32 %v904, 2147483648
        %v915 = vmul.f32 %v913, 1.442695
        %v916 = vpow.pop %v915
        %v917 = vmul.f32 %v914, 1.442695
        %v918 = vpow.pop %v917
        %v919 = vadd.f32 %v916, 1.0
        %v920 = vadd.f32 %v918, 1.0
        %v921 = vrcp.pop %v919
        %v922 = vmul.f32 1.0, %v921
        %v923 = vrcp.pop %v920
        %v924 = vmul.f32 1.0, %v923
        %927 = vrot.lane.b32.xlu0 %v922, 64
        %v928 = vpop.permute.xlu0 %927
        %929 = vrot.lane.b32.xlu0 %v924, 64
        %v930 = vpop.permute.xlu0 %929
        %v933 = vmul.f32 %v901, %v928
        %v934 = vmul.f32 %v904, %v930
        %v935 = vmax.f32 %v744, %v933
        %v936 = vmax.f32 %v745, %v934
        %v937 = vld [vmem:[%s441] sm:$0xf]
        %v938 = vld [vmem:[%s441 + $0x4] sm:$0xf]
        %v939 = vld [vmem:[%s441 + $0x8] sm:$0xf]
        %v940 = vld [vmem:[%s441 + $0xc] sm:$0xf]
        %s941 = sadd.s32 %s432, 2
        %s942 = smul.u32 %s941, 2
        %s943 = smul.addr %s942, 4
        %s944 = scalar_lea.vmem [#allocation2], %s943
        %v945 = vld [vmem:[%s944] sm:$0xf]
        %v946 = vld [vmem:[%s944 + $0x4] sm:$0xf]
        %v947 = vld [vmem:[%s944 + $0x8] sm:$0xf]
        %v948 = vld [vmem:[%s944 + $0xc] sm:$0xf]
        %v949 = vld [vmem:[#allocation9] sm:$0xf]
        %v950 = vld [vmem:[#allocation9 + $0x4] sm:$0xf]
        %s951 = scalar_lea.vmem [#allocation9], 8
        %v952 = vld [vmem:[%s951] sm:$0xf]
        %v953 = vld [vmem:[%s951 + $0x4] sm:$0xf]
        %v958 = vunpack.c.l.b16 %v945
        %v959 = vunpack.c.l.b16 %v946
        %v960 = vunpack.c.l.b16 %v947
        %v961 = vunpack.c.l.b16 %v948
        %v962 = vpack.c.b16 %v959, %v958
        %v963 = vpack.c.b16 %v961, %v960
        %v966 = vunpack.c.l.b16 %v952
        %v967 = vunpack.c.l.b16 %v953
        %v968 = vpack.c.b16 %v967, %v966
        %v971 = vsel %vm494, %v962, 0
        %v974 = vsel %vm494, %v963, 0
        %976 = vmatprep.subr.bf16.mxu0 0
        %977 = vmatpush1.bf16.msra.mxu0 0
        %978 = vmatprep.subr.bf16.mxu0 0
        %979 = vmatpush1.bf16.msra.mxu0 0
        %980 = vmatprep.subr.bf16.mxu0 0
        %981 = vmatpush1.bf16.msra.mxu0 0
        %982 = vmatprep.subr.bf16.mxu0 0
        %983 = vmatpush1.bf16.msra.mxu0 0
        %984 = vmatprep.subr.bf16.mxu0 0
        %985 = vmatpush1.bf16.msra.mxu0 0
        %986 = vmatprep.subr.bf16.mxu0 0
        %987 = vmatpush1.bf16.msra.mxu0 0
        %988 = vmatprep.subr.bf16.mxu0 0
        %989 = vmatpush1.bf16.msra.mxu0 0
        %990 = vmatprep.subr.bf16.mxu0 0
        %991 = vmatpush1.bf16.msra.mxu0 %v968
        %992 = vmatprep.subr.bf16.mxu0 0
        %993 = vmatpush2.bf16.msra.mxu0 0
        %994 = vmatprep.subr.bf16.mxu0 0
        %995 = vmatpush2.bf16.msra.mxu0 0
        %996 = vmatprep.subr.bf16.mxu0 0
        %997 = vmatpush2.bf16.msra.mxu0 0
        %998 = vmatprep.subr.bf16.mxu0 0
        %999 = vmatpush2.bf16.msra.mxu0 0
        %1000 = vmatprep.subr.bf16.mxu0 0
        %1001 = vmatpush2.bf16.msra.mxu0 0
        %1002 = vmatprep.subr.bf16.mxu0 0
        %1003 = vmatpush2.bf16.msra.mxu0 0
        %1004 = vmatprep.subr.bf16.mxu0 0
        %1005 = vmatpush2.bf16.msra.mxu0 0
        %1006 = vmatprep.subr.bf16.mxu0 0
        %1007 = vmatpush2.bf16.msra.mxu0 0
        %1008 = vmatprep.mubr.bf16.mxu0 0
        %1009 = vmatmul.mubr.bf16.gmra.mxu0 %v971
        %v1010 = vpop.f32.mrf.mxu0
        %v1011 = vadd.f32 0.0, %v1010
        %v1012 = vpop.f32.mrf.mxu0
        %v1013 = vpop.f32.mrf.mxu0
        %v1014 = vadd.f32 0.0, %v1013
        %v1015 = vpop.f32.mrf.mxu0
        %1016 = vmatprep.mubr.bf16.mxu0 0
        %1017 = vmatmul.mubr.bf16.gmra.mxu0 %v974
        %v1018 = vpop.f32.mrf.mxu0
        %v1019 = vadd.f32 0.0, %v1018
        %v1020 = vpop.f32.mrf.mxu0
        %v1021 = vpop.f32.mrf.mxu0
        %v1022 = vadd.f32 0.0, %v1021
        %v1023 = vpop.f32.mrf.mxu0
        %1024 = vdwg.mxu0
        %v1029 = vunpack.c.l.b16 %v937
        %v1030 = vunpack.c.l.b16 %v938
        %v1031 = vunpack.c.l.b16 %v939
        %v1032 = vunpack.c.l.b16 %v940
        %v1033 = vpack.c.b16 %v1030, %v1029
        %v1034 = vpack.c.b16 %v1032, %v1031
        %v1037 = vunpack.c.l.b16 %v949
        %v1038 = vunpack.c.l.b16 %v950
        %v1039 = vpack.c.b16 %v1038, %v1037
        %v1042 = vsel %vm494, %v1033, 0
        %v1045 = vsel %vm494, %v1034, 0
        %1047 = vmatprep.subr.bf16.mxu0 0
        %1048 = vmatpush1.bf16.msra.mxu0 0
        %1049 = vmatprep.subr.bf16.mxu0 0
        %1050 = vmatpush1.bf16.msra.mxu0 0
        %1051 = vmatprep.subr.bf16.mxu0 0
        %1052 = vmatpush1.bf16.msra.mxu0 0
        %1053 = vmatprep.subr.bf16.mxu0 0
        %1054 = vmatpush1.bf16.msra.mxu0 0
        %1055 = vmatprep.subr.bf16.mxu0 0
        %1056 = vmatpush1.bf16.msra.mxu0 0
        %1057 = vmatprep.subr.bf16.mxu0 0
        %1058 = vmatpush1.bf16.msra.mxu0 0
        %1059 = vmatprep.subr.bf16.mxu0 0
        %1060 = vmatpush1.bf16.msra.mxu0 0
        %1061 = vmatprep.subr.bf16.mxu0 0
        %1062 = vmatpush1.bf16.msra.mxu0 %v1039
        %1063 = vmatprep.subr.bf16.mxu0 0
        %1064 = vmatpush2.bf16.msra.mxu0 0
        %1065 = vmatprep.subr.bf16.mxu0 0
        %1066 = vmatpush2.bf16.msra.mxu0 0
        %1067 = vmatprep.subr.bf16.mxu0 0
        %1068 = vmatpush2.bf16.msra.mxu0 0
        %1069 = vmatprep.subr.bf16.mxu0 0
        %1070 = vmatpush2.bf16.msra.mxu0 0
        %1071 = vmatprep.subr.bf16.mxu0 0
        %1072 = vmatpush2.bf16.msra.mxu0 0
        %1073 = vmatprep.subr.bf16.mxu0 0
        %1074 = vmatpush2.bf16.msra.mxu0 0
        %1075 = vmatprep.subr.bf16.mxu0 0
        %1076 = vmatpush2.bf16.msra.mxu0 0
        %1077 = vmatprep.subr.bf16.mxu0 0
        %1078 = vmatpush2.bf16.msra.mxu0 0
        %1079 = vmatprep.mubr.bf16.mxu0 0
        %1080 = vmatmul.mubr.bf16.gmra.mxu0 %v1042
        %v1081 = vpop.f32.mrf.mxu0
        %v1082 = vadd.f32 %v1011, %v1081
        %v1083 = vpop.f32.mrf.mxu0
        %v1084 = vpop.f32.mrf.mxu0
        %v1085 = vadd.f32 %v1014, %v1084
        %v1086 = vpop.f32.mrf.mxu0
        %1087 = vmatprep.mubr.bf16.mxu0 0
        %1088 = vmatmul.mubr.bf16.gmra.mxu0 %v1045
        %v1089 = vpop.f32.mrf.mxu0
        %v1090 = vadd.f32 %v1019, %v1089
        %v1091 = vpop.f32.mrf.mxu0
        %v1092 = vpop.f32.mrf.mxu0
        %v1093 = vadd.f32 %v1022, %v1092
        %v1094 = vpop.f32.mrf.mxu0
        %1095 = vdwg.mxu0
        %v1096 = vld [vmem:[%s7] sm:$0x1]
        %v1098 = vlaneseq
        %v1099 = vshrl.u32 %v1098, 7
        %v1100 = vsub.s32 0, %v1099
        %v1101 = vrot.slane %v1096, %v1100
        %v1103 = vadd.f32 %v1082, %v1101
        %v1104 = vadd.f32 %v1085, %v1101
        %v1105 = vadd.f32 %v1090, %v1101
        %v1106 = vadd.f32 %v1093, %v1101
        %v1107 = vadd.f32 %v935, %v1103
        %v1108 = vadd.f32 %v936, %v1104
        %1109 = vst.msk [vmem:[%s423] sm:$0xff] %vm615, %v1107
        %1110 = vst.msk [vmem:[%s423 + $0x10] sm:$0xff] %vm615, %v1108
        %1113 = vrot.lane.b32.xlu0 %v1105, 32
        %v1114 = vpop.permute.xlu0 %1113
        %1115 = vrot.lane.b32.xlu0 %v1106, 32
        %v1116 = vpop.permute.xlu0 %1115
        %v1119 = vadd.f32 %v935, %v1114
        %v1120 = vadd.f32 %v936, %v1116
        %1123 = vrot.lane.b32.xlu0 %v1119, 96
        %v1124 = vpop.permute.xlu0 %1123
        %1125 = vrot.lane.b32.xlu0 %v1120, 96
        %v1126 = vpop.permute.xlu0 %1125
        %s1129 = scalar_lea.vmem %s423, 8 [#allocation10]
        %1130 = vst.msk [vmem:[%s1129] sm:$0xff] %vm615, %v1124
        %1131 = vst.msk [vmem:[%s1129 + $0x10] sm:$0xff] %vm615, %v1126
        %s1132 = sand.u32 %s220, 1
        %s1133 = scalar_lea.sflag [#allocation4], %s1132
        %s1134 = sand.u32 %s220, 1
        %s1135 = smul.addr %s1134, 32
        %s1136 = scalar_lea.vmem [#allocation10], %s1135
        // Predicated region
        $region73: #{tpu_custom_call.1} parent=51 // pred_check
          %p1137 = pneg %p230
        $region74: #{tpu_custom_call.1} parent=51 // pred_check_branch
          %1139 = sbr.rel (%p1137) target = $region76
        $region75: #{tpu_custom_call.1} parent=51 // pred_region
          #allocation12 [shape = 'u32[6]{0}', space=smem, size = 0x18, scoped, tag = 'DMA stride descriptor']
          %s1140 = smul.u32 2, %s24
          %s1142 = ssub.s32 512, 512
          %1143 = vsyncadd %s1133, %s1142
          %s1144 = smul.addr %s1140, 128
          %s1145 = scalar_lea.hbm %s8, %s1144
          %s1147 = sshll.u32 1, 14
          %s1148 = sxor.u32 4294967295, %s1147
          %s1151 = sshll.u32 7, 18
          %s1152 = sxor.u32 4294967295, %s1151
          %s1153 = sand.u32 0, %s1152
          %s1155 = sor.u32 %s1153, 0
          %s1156 = sshll.u32 %s1136, 4
          %s1157 = int_to_ptr.vmem [resolvable:$true] %s1156
          %1163 = sst [smem:[#allocation12]] 256
          %s1164 = scalar_lea.smem [#allocation12], 1
          %1165 = sst [smem:[%s1164]] 512
          %s1166 = scalar_lea.smem [#allocation12], 2
          %1167 = sst [smem:[%s1166]] 2
          %s1168 = scalar_lea.smem [#allocation12], 3
          %1169 = sst [smem:[%s1168]] 128
          %s1170 = scalar_lea.smem [#allocation12], 4
          %1171 = sst [smem:[%s1170]] 128
          %s1172 = scalar_lea.smem [#allocation12], 5
          %1173 = sst [smem:[%s1172]] 8
          %1175 = dma.general %s1157, 512, %s1145, %s1133, 131072, [#allocation12], %s1155, 0
        $region76: #{tpu_custom_call.1} parent=51 // pred_fallthru
          _
      $region52: #{tpu_custom_call.1} parent=5 // pred_fallthru
        _
      %p1176 = scmp.le.s32.totalorder 2, %s19
      // Predicated region
      $region77: #{tpu_custom_call.1} parent=5 // pred_check
        %p1177 = pneg %p1176
      $region78: #{tpu_custom_call.1} parent=5 // pred_check_branch
        %1179 = sbr.rel (%p1177) target = $region80
      $region79: #{tpu_custom_call.1} parent=5 // pred_region
        %s1180 = ssub.s32 %s19, 2
        // Predicated region
        $region81: #{tpu_custom_call.1} parent=79 // pred_check
          %p1181 = pneg %p236
        $region82: #{tpu_custom_call.1} parent=79 // pred_check_branch
          %1183 = sbr.rel (%p1181) target = $region84
        $region83: #{tpu_custom_call.1} parent=79 // pred_region
          %s1184 = sand.u32 %s221, 1
          %s1185 = scalar_lea.sflag [#allocation4], %s1184
          %s1186 = sand.u32 %s221, 1
          %s1187 = smul.addr %s1186, 32
          %s1188 = scalar_lea.vmem [#allocation10], %s1187
          %1189 = dma.done %s1185, 512
        $region84: #{tpu_custom_call.1} parent=79 // pred_fallthru
          _
      $region80: #{tpu_custom_call.1} parent=5 // pred_fallthru
        _
    $region6: #{tpu_custom_call.1} parent=1 // loop_footer
      %s23 = sadd.s32 1, %s19
    $region7: #{tpu_custom_call.1} parent=1 // loop_footer_branch
      %18 = sbr.rel target = $region3
    $region8: #{tpu_custom_call.1} parent=1 // loop_exit
      _
    %1190 = vsyncpa [#allocation3], 1
    %s1191 = scalar_lea.sflag [#allocation3], 1
    %1192 = vsyncpa %s1191, 1
    %1193 = vsyncpa [#allocation6], 1
    %1194 = vsyncpa [#allocation4], 1
    %s1195 = scalar_lea.sflag [#allocation4], 1
    %1196 = vsyncpa %s1195, 1

</llo_original>
